<compile_context>
chip_gen: v5e
topology: v5e:2x2
jax: 0.10.0
libtpu: 0.0.40
codegen_flags: <defaults>
</compile_context>

<pallas_src>
import functools

import jax
import jax.numpy as jnp
import numpy as np
from jax.experimental import pallas as pl
from jax.experimental.pallas import tpu as pltpu

_LANES = 128
_TARGET_BLOCK_BYTES = 2 * 1024 * 1024   # ~2 MiB output block per grid step


def _round_up(x, m):
    return ((x + m - 1) // m) * m


# --------------------------------------------------------------------------
# Packed kernel: output block (tr, 128) is bit-identical to the row-major
# (tr * k, n_rbf) slab, where k = 128 // n_rbf.
# --------------------------------------------------------------------------
def _exp_normal_basis_packed_kernel(d_ref, mu_ref, nbeta_ref, out_ref, *,
                                    n_rbf, k):
    tr = d_ref.shape[0]
    d = d_ref[...]                                            # (tr, k) f32

    # Output lane j holds distance column j // n_rbf of this packed row.
    # Replicate via lane-broadcasts + threshold selects (no reshape/concat):
    # after processing column c, lanes >= c*n_rbf hold column c.
    lane = jax.lax.broadcasted_iota(jnp.int32, (1, _LANES), 1)
    d_full = jnp.broadcast_to(d[:, 0:1], (tr, _LANES))
    for c in range(1, k):                                     # k <= 16, static
        col = jnp.broadcast_to(d[:, c:c + 1], (tr, _LANES))
        d_full = jnp.where(lane >= c * n_rbf, col, d_full)

    diff = jnp.exp(-d_full) - mu_ref[...]                     # dense EUP exp
    out_ref[...] = jnp.exp(nbeta_ref[...] * diff * diff)      # dense EUP exp


# --------------------------------------------------------------------------
# Fallback kernel: row-major (te, n_rbf) output (n_rbf not a divisor of 128).
# --------------------------------------------------------------------------
def _exp_normal_basis_rowmajor_kernel(d_ref, mu_ref, nbeta_ref, out_ref):
    diff = jnp.exp(-d_ref[...]) - mu_ref[...]                 # (te,1)->(te,R)
    out_ref[...] = jnp.exp(nbeta_ref[...] * diff * diff)


# --------------------------------------------------------------------------
# Wrapper
# --------------------------------------------------------------------------
def exp_normal_basis(dist, mu, beta, *, target_block_bytes=_TARGET_BLOCK_BYTES):
    """Computes exp(-beta * (exp(-dist) - mu)**2) with a trailing n_rbf axis.

    dist: float array of any shape.   mu, beta: (n_rbf,) float arrays.
    Returns: dist.shape + (n_rbf,) float32.
    """
    orig_shape = dist.shape
    n_rbf = int(mu.shape[-1])

    d_flat = dist.reshape(-1).astype(jnp.float32)
    e_total = int(d_flat.shape[0])
    if e_total == 0:
        return jnp.zeros((*orig_shape, n_rbf), jnp.float32)

    mu_f = mu.reshape(-1).astype(jnp.float32)
    nbeta_f = (-beta).reshape(-1).astype(jnp.float32)          # neg-beta micro-opt

    params = pltpu.CompilerParams(dimension_semantics=("parallel",))
    tile = lambda i: (i, 0)
    const = lambda i: (0, 0)

    if n_rbf >= 8 and _LANES % n_rbf == 0:
        # ------------- packed, lane-dense path -------------
        k = _LANES // n_rbf
        rows_needed = (e_total + k - 1) // k
        tr_max = max(8, target_block_bytes // (_LANES * 4))    # ~4096 rows
        tr = max(8, min(tr_max, _round_up(rows_needed, 8)))
        rows_pad = _round_up(rows_needed, tr)

        d2 = jnp.pad(d_flat, (0, rows_pad * k - e_total)).reshape(rows_pad, k)
        mu2 = jnp.tile(mu_f, k).reshape(1, _LANES)
        nbeta2 = jnp.tile(nbeta_f, k).reshape(1, _LANES)

        kernel = functools.partial(_exp_normal_basis_packed_kernel,
                                   n_rbf=n_rbf, k=k)
        out = pl.pallas_call(
            kernel,
            out_shape=jax.ShapeDtypeStruct((rows_pad, _LANES), jnp.float32),
            grid_spec=pltpu.PrefetchScalarGridSpec(
                num_scalar_prefetch=0,
                grid=(rows_pad // tr,),
                in_specs=[
                    pl.BlockSpec((tr, k), tile),          # packed distances
                    pl.BlockSpec((1, _LANES), const),     # tiled mu
                    pl.BlockSpec((1, _LANES), const),     # tiled -beta
                ],
                out_specs=pl.BlockSpec((tr, _LANES), tile),
            ),
            compiler_params=params,
        )(d2, mu2, nbeta2)

        # (rows_pad, 128) row-major == (rows_pad*k, n_rbf) row-major bit-for-bit.
        out = out.reshape(rows_pad * k, n_rbf)[:e_total]
    else:
        # ------------- row-major fallback path -------------
        te_max = max(8, (target_block_bytes // (n_rbf * 4)) // 8 * 8)
        te = max(8, min(te_max, _round_up(e_total, 8)))
        e_pad = _round_up(e_total, te)

        d2 = jnp.pad(d_flat, (0, e_pad - e_total)).reshape(e_pad, 1)
        mu2 = mu_f.reshape(1, n_rbf)
        nbeta2 = nbeta_f.reshape(1, n_rbf)

        out = pl.pallas_call(
            _exp_normal_basis_rowmajor_kernel,
            out_shape=jax.ShapeDtypeStruct((e_pad, n_rbf), jnp.float32),
            grid_spec=pltpu.PrefetchScalarGridSpec(
                num_scalar_prefetch=0,
                grid=(e_pad // te,),
                in_specs=[
                    pl.BlockSpec((te, 1), tile),
                    pl.BlockSpec((1, n_rbf), const),
                    pl.BlockSpec((1, n_rbf), const),
                ],
                out_specs=pl.BlockSpec((te, n_rbf), tile),
            ),
            compiler_params=params,
        )(d2, mu2, nbeta2)
        out = out[:e_total]

    return out.reshape(*orig_shape, n_rbf)


# --------------------------------------------------------------------------
# Parameter init matching the PyTorch __init__ (learnable flags only decide
# whether buffers are nn.Parameters; forward math is identical).
# --------------------------------------------------------------------------
def init_params(n_rbf, cutoff):
    mu = jnp.linspace(np.exp(-cutoff), 1.0, n_rbf, dtype=jnp.float32)
    init_beta = (2.0 / n_rbf * (1.0 - np.exp(-cutoff))) ** (-2)
    beta = jnp.ones_like(mu) * jnp.float32(init_beta)
    return {"mu": mu, "beta": beta}


# --------------------------------------------------------------------------
# Pure-JAX reference (mirrors the PyTorch forward).
# --------------------------------------------------------------------------
def reference(dist, mu, beta):
    d = dist[..., None].astype(jnp.float32)
    arg = beta * (jnp.exp(-d) - mu) ** 2
    return jnp.exp(-arg)


if __name__ == "__main__":
    # --- primary check: n_rbf=16 (packed lane-dense path) ------------------
    n_rbf, cutoff = 16, 5.0
    p = init_params(n_rbf, cutoff)
    dist = jax.random.uniform(jax.random.PRNGKey(0), (4, 16), jnp.float32,
                              minval=0.0, maxval=6.0)
    dist = dist.at[0, 0].set(0.0)                     # exercise d == 0
    out = jax.block_until_ready(exp_normal_basis(dist, p["mu"], p["beta"]))
    ref = reference(dist, p["mu"], p["beta"])
    assert out.shape == (4, 16, n_rbf)
    assert jnp.allclose(out, ref, atol=1e-6, rtol=1e-6), "mismatch (packed, 16)"

    # --- packed path with row padding: n_rbf=32, E=21 ----------------------
    n_rbf2, cutoff2 = 32, 4.0
    p2 = init_params(n_rbf2, cutoff2)
    dist2 = jax.random.uniform(jax.random.PRNGKey(1), (3, 7), jnp.float32,
                               minval=0.0, maxval=5.0)
    out2 = jax.block_until_ready(exp_normal_basis(dist2, p2["mu"], p2["beta"]))
    ref2 = reference(dist2, p2["mu"], p2["beta"])
    assert out2.shape == (3, 7, n_rbf2)
    assert jnp.allclose(out2, ref2, atol=1e-6, rtol=1e-6), "mismatch (packed, 32)"

    # --- fallback row-major path: n_rbf=20 (does not divide 128) -----------
    n_rbf3, cutoff3 = 20, 5.0
    p3 = init_params(n_rbf3, cutoff3)
    dist3 = jax.random.uniform(jax.random.PRNGKey(2), (2, 9), jnp.float32,
                               minval=0.0, maxval=6.0)
    out3 = jax.block_until_ready(exp_normal_basis(dist3, p3["mu"], p3["beta"]))
    ref3 = reference(dist3, p3["mu"], p3["beta"])
    assert out3.shape == (2, 9, n_rbf3)
    assert jnp.allclose(out3, ref3, atol=1e-6, rtol=1e-6), "mismatch (fallback, 20)"

    print("KERNEL_OK")
</pallas_src>

<mosaic_0001>
module attributes {stable_mosaic.version = 11 : i64} {
  func.func @_exp_normal_basis_packed_kernel(%arg0: i32, %arg1: memref<8x8xf32, #tpu.memory_space<vmem>>, %arg2: memref<1x128xf32, #tpu.memory_space<vmem>>, %arg3: memref<1x128xf32, #tpu.memory_space<vmem>>, %arg4: memref<8x128xf32, #tpu.memory_space<vmem>>) attributes {dimension_semantics = [#tpu.dimension_semantics<parallel>], iteration_bounds = array<i64: 1>, scalar_prefetch = 0 : i64, scratch_operands = 0 : i64, tpu.core_type = #tpu.core_type<tc>, window_params = [{transform_indices = @transform_0, window_bounds = array<i64: 8, 8>}, {pipeline_mode = #tpu.pipeline_mode<synchronous>, transform_indices = @transform_1, window_bounds = array<i64: 1, 128>}, {pipeline_mode = #tpu.pipeline_mode<synchronous>, transform_indices = @transform_2, window_bounds = array<i64: 1, 128>}, {transform_indices = @transform_3, window_bounds = array<i64: 8, 128>}]} {
    %c0 = arith.constant 0 : index
    %c0_0 = arith.constant 0 : index
    %0 = vector.load %arg1[%c0, %c0_0] : memref<8x8xf32, #tpu.memory_space<vmem>>, vector<8x8xf32>
    %1 = tpu.iota {dimensions = array<i32: 1>} : vector<1x128xi32>
    %2 = vector.extract_strided_slice %0 {offsets = [0, 0], sizes = [8, 1], strides = [1, 1]} : vector<8x8xf32> to vector<8x1xf32>
    %3 = vector.shape_cast %2 : vector<8x1xf32> to vector<8x1xf32>
    %4 = vector.broadcast %3 : vector<8x1xf32> to vector<8x128xf32>
    %5 = vector.extract_strided_slice %0 {offsets = [0, 1], sizes = [8, 1], strides = [1, 1]} : vector<8x8xf32> to vector<8x1xf32>
    %6 = vector.shape_cast %5 : vector<8x1xf32> to vector<8x1xf32>
    %7 = vector.broadcast %6 : vector<8x1xf32> to vector<8x128xf32>
    %c16_i32 = arith.constant 16 : i32
    %8 = vector.broadcast %c16_i32 : i32 to vector<1x128xi32>
    %9 = arith.cmpi sge, %1, %8 : vector<1x128xi32>
    %10 = vector.shape_cast %9 : vector<1x128xi1> to vector<1x128xi1>
    %11 = vector.broadcast %10 : vector<1x128xi1> to vector<8x128xi1>
    %12 = arith.select %11, %7, %4 : vector<8x128xi1>, vector<8x128xf32>
    %13 = vector.extract_strided_slice %0 {offsets = [0, 2], sizes = [8, 1], strides = [1, 1]} : vector<8x8xf32> to vector<8x1xf32>
    %14 = vector.shape_cast %13 : vector<8x1xf32> to vector<8x1xf32>
    %15 = vector.broadcast %14 : vector<8x1xf32> to vector<8x128xf32>
    %c32_i32 = arith.constant 32 : i32
    %16 = vector.broadcast %c32_i32 : i32 to vector<1x128xi32>
    %17 = arith.cmpi sge, %1, %16 : vector<1x128xi32>
    %18 = vector.shape_cast %17 : vector<1x128xi1> to vector<1x128xi1>
    %19 = vector.broadcast %18 : vector<1x128xi1> to vector<8x128xi1>
    %20 = arith.select %19, %15, %12 : vector<8x128xi1>, vector<8x128xf32>
    %21 = vector.extract_strided_slice %0 {offsets = [0, 3], sizes = [8, 1], strides = [1, 1]} : vector<8x8xf32> to vector<8x1xf32>
    %22 = vector.shape_cast %21 : vector<8x1xf32> to vector<8x1xf32>
    %23 = vector.broadcast %22 : vector<8x1xf32> to vector<8x128xf32>
    %c48_i32 = arith.constant 48 : i32
    %24 = vector.broadcast %c48_i32 : i32 to vector<1x128xi32>
    %25 = arith.cmpi sge, %1, %24 : vector<1x128xi32>
    %26 = vector.shape_cast %25 : vector<1x128xi1> to vector<1x128xi1>
    %27 = vector.broadcast %26 : vector<1x128xi1> to vector<8x128xi1>
    %28 = arith.select %27, %23, %20 : vector<8x128xi1>, vector<8x128xf32>
    %29 = vector.extract_strided_slice %0 {offsets = [0, 4], sizes = [8, 1], strides = [1, 1]} : vector<8x8xf32> to vector<8x1xf32>
    %30 = vector.shape_cast %29 : vector<8x1xf32> to vector<8x1xf32>
    %31 = vector.broadcast %30 : vector<8x1xf32> to vector<8x128xf32>
    %c64_i32 = arith.constant 64 : i32
    %32 = vector.broadcast %c64_i32 : i32 to vector<1x128xi32>
    %33 = arith.cmpi sge, %1, %32 : vector<1x128xi32>
    %34 = vector.shape_cast %33 : vector<1x128xi1> to vector<1x128xi1>
    %35 = vector.broadcast %34 : vector<1x128xi1> to vector<8x128xi1>
    %36 = arith.select %35, %31, %28 : vector<8x128xi1>, vector<8x128xf32>
    %37 = vector.extract_strided_slice %0 {offsets = [0, 5], sizes = [8, 1], strides = [1, 1]} : vector<8x8xf32> to vector<8x1xf32>
    %38 = vector.shape_cast %37 : vector<8x1xf32> to vector<8x1xf32>
    %39 = vector.broadcast %38 : vector<8x1xf32> to vector<8x128xf32>
    %c80_i32 = arith.constant 80 : i32
    %40 = vector.broadcast %c80_i32 : i32 to vector<1x128xi32>
    %41 = arith.cmpi sge, %1, %40 : vector<1x128xi32>
    %42 = vector.shape_cast %41 : vector<1x128xi1> to vector<1x128xi1>
    %43 = vector.broadcast %42 : vector<1x128xi1> to vector<8x128xi1>
    %44 = arith.select %43, %39, %36 : vector<8x128xi1>, vector<8x128xf32>
    %45 = vector.extract_strided_slice %0 {offsets = [0, 6], sizes = [8, 1], strides = [1, 1]} : vector<8x8xf32> to vector<8x1xf32>
    %46 = vector.shape_cast %45 : vector<8x1xf32> to vector<8x1xf32>
    %47 = vector.broadcast %46 : vector<8x1xf32> to vector<8x128xf32>
    %c96_i32 = arith.constant 96 : i32
    %48 = vector.broadcast %c96_i32 : i32 to vector<1x128xi32>
    %49 = arith.cmpi sge, %1, %48 : vector<1x128xi32>
    %50 = vector.shape_cast %49 : vector<1x128xi1> to vector<1x128xi1>
    %51 = vector.broadcast %50 : vector<1x128xi1> to vector<8x128xi1>
    %52 = arith.select %51, %47, %44 : vector<8x128xi1>, vector<8x128xf32>
    %53 = vector.extract_strided_slice %0 {offsets = [0, 7], sizes = [8, 1], strides = [1, 1]} : vector<8x8xf32> to vector<8x1xf32>
    %54 = vector.shape_cast %53 : vector<8x1xf32> to vector<8x1xf32>
    %55 = vector.broadcast %54 : vector<8x1xf32> to vector<8x128xf32>
    %c112_i32 = arith.constant 112 : i32
    %56 = vector.broadcast %c112_i32 : i32 to vector<1x128xi32>
    %57 = arith.cmpi sge, %1, %56 : vector<1x128xi32>
    %58 = vector.shape_cast %57 : vector<1x128xi1> to vector<1x128xi1>
    %59 = vector.broadcast %58 : vector<1x128xi1> to vector<8x128xi1>
    %60 = arith.select %59, %55, %52 : vector<8x128xi1>, vector<8x128xf32>
    %cst = arith.constant 0.000000e+00 : f32
    %61 = vector.broadcast %cst : f32 to vector<8x128xf32>
    %62 = arith.subf %61, %60 : vector<8x128xf32>
    %63 = math.exp %62 : vector<8x128xf32>
    %c0_1 = arith.constant 0 : index
    %c0_2 = arith.constant 0 : index
    %64 = vector.load %arg2[%c0_1, %c0_2] : memref<1x128xf32, #tpu.memory_space<vmem>>, vector<1x128xf32>
    %65 = vector.broadcast %64 : vector<1x128xf32> to vector<8x128xf32>
    %66 = arith.subf %63, %65 : vector<8x128xf32>
    %c0_3 = arith.constant 0 : index
    %c0_4 = arith.constant 0 : index
    %67 = vector.load %arg3[%c0_3, %c0_4] : memref<1x128xf32, #tpu.memory_space<vmem>>, vector<1x128xf32>
    %68 = vector.broadcast %67 : vector<1x128xf32> to vector<8x128xf32>
    %69 = arith.mulf %68, %66 : vector<8x128xf32>
    %70 = arith.mulf %69, %66 : vector<8x128xf32>
    %71 = math.exp %70 : vector<8x128xf32>
    %c0_5 = arith.constant 0 : index
    %c0_6 = arith.constant 0 : index
    %72 = vector.load %arg4[%c0_5, %c0_6] : memref<8x128xf32, #tpu.memory_space<vmem>>, vector<8x128xf32>
    tpu.vector_store %arg4[%c0_5, %c0_6], %71 {strides = array<i32>} : memref<8x128xf32, #tpu.memory_space<vmem>>, vector<8x128xf32>,
    return
  }
  func.func @transform_0(%arg0: i32) -> (i32, i32) {
    %c0_i32 = arith.constant 0 : i32
    %c0_i32_0 = arith.constant 0 : i32
    return %arg0, %c0_i32 : i32, i32
  }
  func.func @transform_1(%arg0: i32) -> (i32, i32) {
    %c0_i32 = arith.constant 0 : i32
    %c0_i32_0 = arith.constant 0 : i32
    %c0_i32_1 = arith.constant 0 : i32
    return %c0_i32, %c0_i32_0 : i32, i32
  }
  func.func @transform_2(%arg0: i32) -> (i32, i32) {
    %c0_i32 = arith.constant 0 : i32
    %c0_i32_0 = arith.constant 0 : i32
    %c0_i32_1 = arith.constant 0 : i32
    return %c0_i32, %c0_i32_0 : i32, i32
  }
  func.func @transform_3(%arg0: i32) -> (i32, i32) {
    %c0_i32 = arith.constant 0 : i32
    %c0_i32_0 = arith.constant 0 : i32
    return %arg0, %c0_i32 : i32, i32
  }
}

</mosaic_0001>

<llo_original>
// kernel: tpu_custom_call.1
$region0: #{tpu_custom_call.1}
  #allocation0 [shape = 'u32[]', space=smem, size = 0x4, offset = 0x4, fixed_abs, tag = 'smem constant byte address 0x4 - core index']
  #allocation1 [shape = 'u32[72,128]{1,0:T(1,128)}', space=vmem, size = 0x9000, scoped, tag = 'internal scratch']
  %s0 = inlined_call_operand.hbm [shape: f32[8,8], index: 0, kind: input, shape index: {}]
  %s1 = inlined_call_operand.hbm [shape: f32[1,128], index: 1, kind: input, shape index: {}]
  %s2 = inlined_call_operand.vmem [shape: f32[1,128], index: 2, kind: input, shape index: {}]
  %s3 = inlined_call_operand.hbm [shape: f32[8,128], index: 3, kind: output, shape index: {}]
  %s4 = sld [smem:[#allocation0]]
  $region30: #{tpu_custom_call.1} parent=0
    _
  %s6 = ssub.s32 1, %s4
  %s7 = scalar_select 0, %s6, %s4
  $region1: #{tpu_custom_call.1} parent=0
    #allocation2 [shape = 'u8[4096]{0}', space=vmem, size = 0x1000, scoped, tag = 'input window, operand 0, single buffered']
    #allocation3 [shape = 's32[1]{0}', space=sflag, size = 0x4, scoped, tag = 'scoped memory for tpu_custom_call.1']
    #allocation4 [shape = 's32[1]{0}', space=sflag, size = 0x4, scoped, tag = 'scoped memory for tpu_custom_call.1']
    #allocation5 [shape = 'u8[512]{0}', space=vmem, size = 0x400, scoped, tag = 'input window, operand 1, single buffered']
    #allocation6 [shape = 's32[1]{0}', space=sflag, size = 0x4, scoped, tag = 'scoped memory for tpu_custom_call.1']
    #allocation7 [shape = 'u8[4096]{0}', space=vmem, size = 0x1000, scoped, tag = 'output window, operand 0, single buffered']
    %8 = vsyncpa [#allocation3], 0
    %9 = vsyncpa [#allocation6], 0
    %10 = vsyncpa [#allocation4], 0
    // Predicated region
    $region2: #{tpu_custom_call.1} parent=1 // pred_check
      _
    $region3: #{tpu_custom_call.1} parent=1 // pred_check_branch
      %12 = sbr.rel (0) target = $region5
    $region4: #{tpu_custom_call.1} parent=1 // pred_region
      %14 = vsyncadd [#allocation3], 0
      %s16 = sshll.u32 %s0, 4
      %s17 = int_to_ptr.hbm [resolvable:$true] %s16
      %s18 = sshll.u32 [#allocation2], 4
      %s19 = int_to_ptr.vmem [resolvable:$true] %s18
      %21 = dma.hbm_to_vmem [thread:$0]  %s17, 128, %s19, [#allocation3]
    $region5: #{tpu_custom_call.1} parent=1 // pred_fallthru
      _
    // Predicated region
    $region6: #{tpu_custom_call.1} parent=1 // pred_check
      _
    $region7: #{tpu_custom_call.1} parent=1 // pred_check_branch
      %23 = sbr.rel (0) target = $region9
    $region8: #{tpu_custom_call.1} parent=1 // pred_region
      %25 = vsyncadd [#allocation6], 0
      %s27 = sshll.u32 %s1, 4
      %s28 = int_to_ptr.hbm [resolvable:$true] %s27
      %s29 = sshll.u32 [#allocation5], 4
      %s30 = int_to_ptr.vmem [resolvable:$true] %s29
      %32 = dma.hbm_to_vmem [thread:$0]  %s28, 16, %s30, [#allocation6]
    $region9: #{tpu_custom_call.1} parent=1 // pred_fallthru
      _
    // Predicated region
    $region10: #{tpu_custom_call.1} parent=1 // pred_check
      _
    $region11: #{tpu_custom_call.1} parent=1 // pred_check_branch
      %34 = sbr.rel (0) target = $region13
    $region12: #{tpu_custom_call.1} parent=1 // pred_region
      _
    $region13: #{tpu_custom_call.1} parent=1 // pred_fallthru
      _
    // Predicated region
    $region14: #{tpu_custom_call.1} parent=1 // pred_check
      _
    $region15: #{tpu_custom_call.1} parent=1 // pred_check_branch
      %36 = sbr.rel (0) target = $region17
    $region16: #{tpu_custom_call.1} parent=1 // pred_region
      %38 = dma.done [#allocation3], 128
    $region17: #{tpu_custom_call.1} parent=1 // pred_fallthru
      _
    // Predicated region
    $region18: #{tpu_custom_call.1} parent=1 // pred_check
      _
    $region19: #{tpu_custom_call.1} parent=1 // pred_check_branch
      %40 = sbr.rel (0) target = $region21
    $region20: #{tpu_custom_call.1} parent=1 // pred_region
      %42 = dma.done [#allocation6], 16
    $region21: #{tpu_custom_call.1} parent=1 // pred_fallthru
      _
    %v43 = vld [vmem:[#allocation2] sm:$0xff]
    %v44 = vlaneseq
    %v45 = vand.u32 %v44, 127
    %47 = vset.pattern.permute.xlu0 0
    %48 = vperm.xlu0 %47, %v43
    %v49 = vpop.permute.xlu0 %48
    %51 = vset.pattern.permute.xlu0 1
    %52 = vperm.xlu0 %51, %v43
    %v53 = vpop.permute.xlu0 %52
    %vm55 = vcmp.ge.s32.totalorder %v45, 16
    %v56 = vsel %vm55, 1, 0
    %vm57 = vcmp.eq.s32.totalorder %v56, 1
    %v58 = vsel %vm57, %v53, %v49
    %59 = vset.pattern.permute.xlu0 2
    %60 = vperm.xlu0 %59, %v43
    %v61 = vpop.permute.xlu0 %60
    %vm63 = vcmp.ge.s32.totalorder %v45, 32
    %v64 = vsel %vm63, 1, 0
    %vm65 = vcmp.eq.s32.totalorder %v64, 1
    %v66 = vsel %vm65, %v61, %v58
    %67 = vset.pattern.permute.xlu0 3
    %68 = vperm.xlu0 %67, %v43
    %v69 = vpop.permute.xlu0 %68
    %vm71 = vcmp.ge.s32.totalorder %v45, 48
    %v72 = vsel %vm71, 1, 0
    %vm73 = vcmp.eq.s32.totalorder %v72, 1
    %v74 = vsel %vm73, %v69, %v66
    %75 = vset.pattern.permute.xlu0 4
    %76 = vperm.xlu0 %75, %v43
    %v77 = vpop.permute.xlu0 %76
    %vm79 = vcmp.ge.s32.totalorder %v45, 64
    %v80 = vsel %vm79, 1, 0
    %vm81 = vcmp.eq.s32.totalorder %v80, 1
    %v82 = vsel %vm81, %v77, %v74
    %83 = vset.pattern.permute.xlu0 5
    %84 = vperm.xlu0 %83, %v43
    %v85 = vpop.permute.xlu0 %84
    %vm87 = vcmp.ge.s32.totalorder %v45, 80
    %v88 = vsel %vm87, 1, 0
    %vm89 = vcmp.eq.s32.totalorder %v88, 1
    %v90 = vsel %vm89, %v85, %v82
    %91 = vset.pattern.permute.xlu0 6
    %92 = vperm.xlu0 %91, %v43
    %v93 = vpop.permute.xlu0 %92
    %vm95 = vcmp.ge.s32.totalorder %v45, 96
    %v96 = vsel %vm95, 1, 0
    %vm97 = vcmp.eq.s32.totalorder %v96, 1
    %v98 = vsel %vm97, %v93, %v90
    %99 = vset.pattern.permute.xlu0 7
    %100 = vperm.xlu0 %99, %v43
    %v101 = vpop.permute.xlu0 %100
    %vm103 = vcmp.ge.s32.totalorder %v45, 112
    %v104 = vsel %vm103, 1, 0
    %vm105 = vcmp.eq.s32.totalorder %v104, 1
    %v106 = vsel %vm105, %v101, %v98
    %v107 = vsub.f32 0.0, %v106
    %v108 = vmul.f32 %v107, 1.442695
    %v109 = vpow.pop %v108
    %v110 = vld [vmem:[#allocation5] sm:$0x1]
    %v112 = vperm.slane %v110, 0
    %v114 = vsub.f32 %v109, %v112
    %v115 = vld [vmem:[%s2] sm:$0x1]
    %v117 = vperm.slane %v115, 0
    %v119 = vmul.f32 %v117, %v114
    %v120 = vmul.f32 %v119, %v114
    %v121 = vmul.f32 %v120, 1.442695
    %v122 = vpow.pop %v121
    %123 = vst [vmem:[#allocation7] sm:$0xff] %v122
    // Predicated region
    $region22: #{tpu_custom_call.1} parent=1 // pred_check
      _
    $region23: #{tpu_custom_call.1} parent=1 // pred_check_branch
      %125 = sbr.rel (0) target = $region25
    $region24: #{tpu_custom_call.1} parent=1 // pred_region
      %127 = vsyncadd [#allocation4], 0
      %s129 = sshll.u32 [#allocation7], 4
      %s130 = int_to_ptr.vmem [resolvable:$true] %s129
      %s131 = sshll.u32 %s3, 4
      %s132 = int_to_ptr.hbm [resolvable:$true] %s131
      %134 = dma.vmem_to_hbm [thread:$0]  %s130, 128, %s132, [#allocation4]
    $region25: #{tpu_custom_call.1} parent=1 // pred_fallthru
      _
    // Predicated region
    $region26: #{tpu_custom_call.1} parent=1 // pred_check
      _
    $region27: #{tpu_custom_call.1} parent=1 // pred_check_branch
      %136 = sbr.rel (0) target = $region29
    $region28: #{tpu_custom_call.1} parent=1 // pred_region
      %138 = dma.done [#allocation4], 128
    $region29: #{tpu_custom_call.1} parent=1 // pred_fallthru
      _
    %139 = vsyncpa [#allocation3], 1
    %140 = vsyncpa [#allocation6], 1
    %141 = vsyncpa [#allocation4], 1

</llo_original>
